<compile_context>
chip_gen: v6e
topology: v6e:2x2x1
jax: 0.10.0
libtpu: 0.0.40
codegen_flags: <defaults>
</compile_context>

<pallas_src>
import jax
import jax.numpy as jnp
from jax.experimental import pallas as pl
from jax.experimental.pallas import tpu as pltpu


# ----------------------------- helpers ---------------------------------------
def _round_up(x, m):
    return (x + m - 1) // m * m


def _l2_normalize(v, eps=1e-12):
    return v / (jnp.sqrt(jnp.sum(v * v)) + eps)


def spectral_sigma(weight, u):
    """One power iteration, torch.nn.utils.spectral_norm semantics (no_grad u/v)."""
    cout = weight.shape[0]
    w_mat = weight.reshape(cout, -1)                       # (Cout, Cin*KH*KW)
    v = jax.lax.stop_gradient(_l2_normalize(w_mat.T @ u))
    u_new = jax.lax.stop_gradient(_l2_normalize(w_mat @ v))
    sigma = jnp.dot(u_new, w_mat @ v)
    return sigma.reshape(1), u_new


# ----------------------------- Pallas kernel ----------------------------------
def _make_kernel(*, kh, kw, pad_w, pitch, w_real, cin, cout, tm, neg_slope=0.2):
    """Implicit-GEMM conv tile kernel.

    w_ref : (kh*kw, cout, cin) bf16  -- per-tap weight slices (resident)
    b_ref : (cout, 1)          f32   -- bias (resident)
    xc_ref: (cin, tm)          bf16  -- current flat-input tile
    xh_ref: (cin, HB)          bf16  -- right halo (next HB flat columns)
    o_ref : (cout, tm)               -- output tile (lane-dense stores)
    """

    def kernel(w_ref, b_ref, xc_ref, xh_ref, o_ref):
        # Current tile + halo -> every tap slab is a static lane-offset slice.
        xext = jnp.concatenate([xc_ref[...], xh_ref[...]], axis=-1)  # (cin, tm+HB)

        # Lane -> output column index (for masking width-padding reads).
        q0 = pl.program_id(1) * tm
        ow = (q0 + jax.lax.broadcasted_iota(jnp.int32, (1, tm), 1)) % pitch

        acc = jnp.zeros((cout, tm), jnp.float32)
        for i in range(kh):
            for j in range(kw):
                d = i * pitch + j                     # constant flat shift of this tap
                slab = xext[:, d:d + tm]              # (cin, tm)
                dj = j - pad_w
                # Mask lanes whose tap read falls into the width zero-padding
                # (reads that would otherwise wrap into the neighbouring row).
                if dj < 0 or (pitch - 1 + dj) > (w_real - 1):
                    valid = jnp.logical_and(ow + dj >= 0, ow + dj < w_real)
                    slab = jnp.where(valid, slab, jnp.zeros_like(slab))
                acc = acc + jnp.dot(w_ref[i * kw + j], slab,
                                    preferred_element_type=jnp.float32)

        acc = acc + b_ref[...]                        # bias broadcast over lanes
        # LeakyReLU(0.2) epilogue (VPU filler under the mem-bound regime).
        o_ref[...] = jnp.where(acc >= 0.0, acc, neg_slope * acc).astype(o_ref.dtype)

    return kernel


def _pick_tm(mq, n_batch, cin, cout, hb, out_bytes,
             max_tm=4096, vmem_budget=8 << 20):
    """Largest lane tile (multiple of the halo width hb) fitting a conservative
    double-buffered VMEM budget; prefer tiles that divide mq exactly (no output
    padding / post-slice) and keep >=2 total grid steps (v7x megacore)."""
    cap = max(hb, min(_round_up(mq, hb), max_tm))
    cap -= cap % hb
    cands = [t for t in range(cap, 0, -hb)
             if 2 * (cin * t * 2 + cin * hb * 2 + cout * t * out_bytes) <= vmem_budget]
    if not cands:
        cands = [hb]
    for need_divisor in (True, False):
        for t in cands:
            steps = n_batch * (-(-mq // t))
            if steps >= 2 and (not need_divisor or mq % t == 0):
                return t
    return cands[0]


# ------------------------------ forward ---------------------------------------
def sn_conv_with_activation(x, weight, bias, u, *, stride=1, padding=0,
                            out_dtype=jnp.float32):
    """Forward of SNConvWithActivation. x: NCHW f32. Returns (NCHW, updated u)."""
    N, Cin, H, W = x.shape
    Cout, Cin_w, KH, KW = weight.shape
    assert Cin_w == Cin
    if stride != 1:
        # TODO(synk): strided convs not supported by the fused implicit-GEMM path.
        raise NotImplementedError("fused implicit-GEMM path supports stride=1 only")

    Hout = H + 2 * padding - KH + 1
    Wout = W + 2 * padding - KW + 1
    assert Hout > 0 and Wout > 0

    # Spectral norm: fold sigma into the tiny weight; build per-tap slices.
    sigma, u_new = spectral_sigma(weight, u)
    w_sn = weight / sigma[0]
    w_taps = (w_sn.transpose(2, 3, 0, 1)
              .reshape(KH * KW, Cout, Cin).astype(jnp.bfloat16))
    bias2 = bias.reshape(Cout, 1).astype(jnp.float32)

    # Flat-shift layout: row pitch P, output position q = oh*P + ow, and every
    # tap (i, j) reads flat index q + i*P + j (after prepending `padding` zeros).
    P = max(W, Wout)                                  # q-grid / storage row pitch
    Hp = H + 2 * padding
    d_max = (KH - 1) * P + (KW - 1)
    HB = _round_up(max(d_max, 1), 128)                # halo width, lane aligned

    Mq = Hout * P
    out_bytes = jnp.dtype(out_dtype).itemsize
    TM = _pick_tm(Mq, N, Cin, Cout, HB, out_bytes)
    Mq_pad = _round_up(Mq, TM)
    L = max(Mq_pad + HB, padding + Hp * P)            # flat length incl. halo tail

    # Cast to bf16 BEFORE any padding/reshape (halves wrapper-side HBM traffic).
    x_bf = x.astype(jnp.bfloat16)
    xhp = jnp.pad(x_bf, ((0, 0), (0, 0), (padding, padding), (0, P - W)))
    xflat = xhp.reshape(N, Cin, Hp * P)
    xflat = jnp.pad(xflat, ((0, 0), (0, 0), (padding, L - padding - Hp * P)))

    grid = (N, Mq_pad // TM)
    kernel = _make_kernel(kh=KH, kw=KW, pad_w=padding, pitch=P, w_real=W,
                          cin=Cin, cout=Cout, tm=TM)

    flops = 2 * N * Cout * Cin * KH * KW * Hout * Wout
    bytes_accessed = (xflat.size * 2 + w_taps.size * 2 + bias2.size * 4
                      + N * Cout * Mq_pad * out_bytes)

    out_q = pl.pallas_call(
        kernel,
        out_shape=jax.ShapeDtypeStruct((N, Cout, Mq_pad), out_dtype),
        grid=grid,
        in_specs=[
            pl.BlockSpec((KH * KW, Cout, Cin), lambda n, q: (0, 0, 0)),   # weights
            pl.BlockSpec((Cout, 1), lambda n, q: (0, 0)),                 # bias
            # Current flat tile.  (If profiling shows exposed DMA at large TM,
            # pipeline_mode=pl.Buffered(3) on this spec is the knob.)
            pl.BlockSpec((None, Cin, TM), lambda n, q: (n, 0, q)),
            # Right halo: the next HB flat columns (HB | TM, so block index is exact).
            pl.BlockSpec((None, Cin, HB),
                         lambda n, q: (n, 0, (q + 1) * (TM // HB))),
        ],
        out_specs=pl.BlockSpec((None, Cout, TM), lambda n, q: (n, 0, q)),
        compiler_params=pltpu.CompilerParams(
            dimension_semantics=("parallel", "parallel")),
        cost_estimate=pl.CostEstimate(flops=flops, transcendentals=0,
                                      bytes_accessed=bytes_accessed),
    )(w_taps, bias2, xflat, xflat)

    out = out_q[:, :, :Mq] if Mq_pad != Mq else out_q
    out = out.reshape(N, Cout, Hout, P)
    if P != Wout:
        # Only reached when padding < (KW-1)/2 (output rows narrower than input
        # rows): drop the KW-1-p trailing garbage columns per row.
        out = out[:, :, :, :Wout]
    return out, u_new


# ------------------------------- main ------------------------------------------
if __name__ == "__main__":
    key = jax.random.PRNGKey(0)
    k_x, k_w, k_b, k_u = jax.random.split(key, 4)

    # Module config: in_channels=4, out_channels=8, kernel_size=3, stride=1, padding=1
    N, Cin, H, W = 2, 4, 16, 16
    Cout, KH, KW = 8, 3, 3
    stride, padding = 1, 1

    x = jax.random.normal(k_x, (N, Cin, H, W), jnp.float32)

    # kaiming_normal_ (fan_in) deterministic init
    fan_in = Cin * KH * KW
    w_std = (2.0 / fan_in) ** 0.5
    weight = w_std * jax.random.normal(k_w, (Cout, Cin, KH, KW), jnp.float32)
    # Conv2d default bias init: U(-1/sqrt(fan_in), 1/sqrt(fan_in))
    bound = 1.0 / (fan_in ** 0.5)
    bias = jax.random.uniform(k_b, (Cout,), jnp.float32, -bound, bound)
    # spectral_norm 'u' buffer: random normal, normalized
    u = jax.random.normal(k_u, (Cout,), jnp.float32)
    u = u / (jnp.sqrt(jnp.sum(u * u)) + 1e-12)

    out, _ = sn_conv_with_activation(x, weight, bias, u,
                                     stride=stride, padding=padding)
    out = jax.block_until_ready(out)

    # Reference: plain f32 conv with the spectrally-normalized weight + LeakyReLU.
    sigma, _ = spectral_sigma(weight, u)
    ref = jax.lax.conv_general_dilated(
        x, weight / sigma[0], (stride, stride),
        [(padding, padding), (padding, padding)],
        dimension_numbers=("NCHW", "OIHW", "NCHW"))
    ref = ref + bias.reshape(1, Cout, 1, 1)
    ref = jnp.where(ref >= 0.0, ref, 0.2 * ref)

    Hout = (H + 2 * padding - KH) // stride + 1
    Wout = (W + 2 * padding - KW) // stride + 1
    assert out.shape == (N, Cout, Hout, Wout), out.shape
    # bf16 inputs / weights (f32 MXU accumulation) vs f32 reference.
    assert jnp.allclose(out, ref, atol=3e-2, rtol=3e-2), \
        float(jnp.max(jnp.abs(out - ref)))

    print("KERNEL_OK")
</pallas_src>

<mosaic_0001>
module attributes {stable_mosaic.version = 11 : i64} {
  func.func @kernel(%arg0: i32, %arg1: i32, %arg2: memref<9x8x4xbf16, #tpu.memory_space<vmem>>, %arg3: memref<8x1xf32, #tpu.memory_space<vmem>>, %arg4: memref<1x4x256xbf16, #tpu.memory_space<vmem>>, %arg5: memref<1x4x128xbf16, #tpu.memory_space<vmem>>, %arg6: memref<1x8x256xf32, #tpu.memory_space<vmem>>) attributes {dimension_semantics = [#tpu.dimension_semantics<parallel>, #tpu.dimension_semantics<parallel>], iteration_bounds = array<i64: 2, 1>, scalar_prefetch = 0 : i64, scratch_operands = 0 : i64, tpu.core_type = #tpu.core_type<tc>, window_params = [{pipeline_mode = #tpu.pipeline_mode<synchronous>, transform_indices = @transform_0, window_bounds = array<i64: 9, 8, 4>}, {pipeline_mode = #tpu.pipeline_mode<synchronous>, transform_indices = @transform_1, window_bounds = array<i64: 8, 1>}, {transform_indices = @transform_2, window_bounds = array<i64: 1, 4, 256>}, {transform_indices = @transform_3, window_bounds = array<i64: 1, 4, 128>}, {transform_indices = @transform_4, window_bounds = array<i64: 1, 8, 256>}]} {
    %c0 = arith.constant 0 : index
    %c0_0 = arith.constant 0 : index
    %c0_1 = arith.constant 0 : index
    %0 = vector.load %arg4[%c0, %c0_0, %c0_1] : memref<1x4x256xbf16, #tpu.memory_space<vmem>>, vector<1x4x256xbf16>
    %1 = vector.shape_cast %0 : vector<1x4x256xbf16> to vector<4x256xbf16>
    %c0_2 = arith.constant 0 : index
    %c0_3 = arith.constant 0 : index
    %c0_4 = arith.constant 0 : index
    %2 = vector.load %arg5[%c0_2, %c0_3, %c0_4] : memref<1x4x128xbf16, #tpu.memory_space<vmem>>, vector<1x4x128xbf16>
    %3 = vector.shape_cast %2 : vector<1x4x128xbf16> to vector<4x128xbf16>
    %4 = tpu.concatenate %1, %3 in 1 : vector<4x256xbf16>, vector<4x128xbf16> -> vector<4x384xbf16>
    %c256_i32 = arith.constant 256 : i32
    %5 = arith.muli %arg1, %c256_i32 : i32
    %6 = tpu.iota {dimensions = array<i32: 1>} : vector<1x256xi32>
    %7 = vector.broadcast %5 : i32 to vector<1x256xi32>
    %8 = arith.addi %7, %6 : vector<1x256xi32>
    %c16_i32 = arith.constant 16 : i32
    %c0_i32 = arith.constant 0 : i32
    %9 = arith.cmpi eq, %c16_i32, %c0_i32 : i32
    %c1_i32 = arith.constant 1 : i32
    %10 = arith.select %9, %c1_i32, %c16_i32 : i32
    %11 = vector.broadcast %10 : i32 to vector<1x256xi32>
    %12 = arith.remsi %8, %11 : vector<1x256xi32>
    %c0_i32_5 = arith.constant 0 : i32
    %13 = vector.broadcast %c0_i32_5 : i32 to vector<1x256xi32>
    %14 = arith.cmpi ne, %12, %13 : vector<1x256xi32>
    %c0_i32_6 = arith.constant 0 : i32
    %15 = vector.broadcast %c0_i32_6 : i32 to vector<1x256xi32>
    %16 = arith.cmpi slt, %12, %15 : vector<1x256xi32>
    %c0_i32_7 = arith.constant 0 : i32
    %17 = arith.cmpi slt, %10, %c0_i32_7 : i32
    %18 = vector.broadcast %17 : i1 to vector<1x256xi1>
    %19 = vector.broadcast %18 : vector<1x256xi1> to vector<1x256xi1>
    %20 = arith.xori %16, %19 : vector<1x256xi1>
    %21 = arith.andi %20, %14 : vector<1x256xi1>
    %22 = vector.broadcast %10 : i32 to vector<1x256xi32>
    %23 = arith.addi %12, %22 : vector<1x256xi32>
    %24 = arith.select %21, %23, %12 : vector<1x256xi1>, vector<1x256xi32>
    %cst = arith.constant 0.000000e+00 : f32
    %25 = vector.broadcast %cst : f32 to vector<8x256xf32>
    %26 = vector.extract_strided_slice %4 {offsets = [0, 0], sizes = [4, 256], strides = [1, 1]} : vector<4x384xbf16> to vector<4x256xbf16>
    %c-1_i32 = arith.constant -1 : i32
    %27 = vector.broadcast %c-1_i32 : i32 to vector<1x256xi32>
    %28 = arith.addi %24, %27 : vector<1x256xi32>
    %c0_i32_8 = arith.constant 0 : i32
    %29 = vector.broadcast %c0_i32_8 : i32 to vector<1x256xi32>
    %30 = arith.cmpi sge, %28, %29 : vector<1x256xi32>
    %c-1_i32_9 = arith.constant -1 : i32
    %31 = vector.broadcast %c-1_i32_9 : i32 to vector<1x256xi32>
    %32 = arith.addi %24, %31 : vector<1x256xi32>
    %c16_i32_10 = arith.constant 16 : i32
    %33 = vector.broadcast %c16_i32_10 : i32 to vector<1x256xi32>
    %34 = arith.cmpi slt, %32, %33 : vector<1x256xi32>
    %35 = arith.andi %30, %34 : vector<1x256xi1>
    %cst_11 = arith.constant 0.000000e+00 : bf16
    %36 = vector.broadcast %cst_11 : bf16 to vector<4x256xbf16>
    %37 = vector.shape_cast %35 : vector<1x256xi1> to vector<1x256xi1>
    %38 = vector.broadcast %37 : vector<1x256xi1> to vector<4x256xi1>
    %39 = arith.select %38, %26, %36 : vector<4x256xi1>, vector<4x256xbf16>
    %c0_12 = arith.constant 0 : index
    %c0_13 = arith.constant 0 : index
    %c0_14 = arith.constant 0 : index
    %40 = vector.load %arg2[%c0_12, %c0_13, %c0_14] : memref<9x8x4xbf16, #tpu.memory_space<vmem>>, vector<1x8x4xbf16>
    %41 = vector.shape_cast %40 : vector<1x8x4xbf16> to vector<8x4xbf16>
    %cst_15 = arith.constant dense<0.000000e+00> : vector<8x256xf32>
    %42 = tpu.matmul %41, %39, %cst_15 {dimension_numbers = #tpu.dot_dimension_numbers<[1], [0], [0], [1], [0, 0, 1, 1], [], []>} : vector<8x4xbf16>, vector<4x256xbf16>, vector<8x256xf32> -> vector<8x256xf32>
    %43 = arith.addf %25, %42 : vector<8x256xf32>
    %44 = vector.extract_strided_slice %4 {offsets = [0, 1], sizes = [4, 256], strides = [1, 1]} : vector<4x384xbf16> to vector<4x256xbf16>
    %c1 = arith.constant 1 : index
    %c0_16 = arith.constant 0 : index
    %c0_17 = arith.constant 0 : index
    %45 = vector.load %arg2[%c1, %c0_16, %c0_17] : memref<9x8x4xbf16, #tpu.memory_space<vmem>>, vector<1x8x4xbf16>
    %46 = vector.shape_cast %45 : vector<1x8x4xbf16> to vector<8x4xbf16>
    %cst_18 = arith.constant dense<0.000000e+00> : vector<8x256xf32>
    %47 = tpu.matmul %46, %44, %cst_18 {dimension_numbers = #tpu.dot_dimension_numbers<[1], [0], [0], [1], [0, 0, 1, 1], [], []>} : vector<8x4xbf16>, vector<4x256xbf16>, vector<8x256xf32> -> vector<8x256xf32>
    %48 = arith.addf %43, %47 : vector<8x256xf32>
    %49 = vector.extract_strided_slice %4 {offsets = [0, 2], sizes = [4, 256], strides = [1, 1]} : vector<4x384xbf16> to vector<4x256xbf16>
    %c1_i32_19 = arith.constant 1 : i32
    %50 = vector.broadcast %c1_i32_19 : i32 to vector<1x256xi32>
    %51 = arith.addi %24, %50 : vector<1x256xi32>
    %c0_i32_20 = arith.constant 0 : i32
    %52 = vector.broadcast %c0_i32_20 : i32 to vector<1x256xi32>
    %53 = arith.cmpi sge, %51, %52 : vector<1x256xi32>
    %c1_i32_21 = arith.constant 1 : i32
    %54 = vector.broadcast %c1_i32_21 : i32 to vector<1x256xi32>
    %55 = arith.addi %24, %54 : vector<1x256xi32>
    %c16_i32_22 = arith.constant 16 : i32
    %56 = vector.broadcast %c16_i32_22 : i32 to vector<1x256xi32>
    %57 = arith.cmpi slt, %55, %56 : vector<1x256xi32>
    %58 = arith.andi %53, %57 : vector<1x256xi1>
    %cst_23 = arith.constant 0.000000e+00 : bf16
    %59 = vector.broadcast %cst_23 : bf16 to vector<4x256xbf16>
    %60 = vector.shape_cast %58 : vector<1x256xi1> to vector<1x256xi1>
    %61 = vector.broadcast %60 : vector<1x256xi1> to vector<4x256xi1>
    %62 = arith.select %61, %49, %59 : vector<4x256xi1>, vector<4x256xbf16>
    %c2 = arith.constant 2 : index
    %c0_24 = arith.constant 0 : index
    %c0_25 = arith.constant 0 : index
    %63 = vector.load %arg2[%c2, %c0_24, %c0_25] : memref<9x8x4xbf16, #tpu.memory_space<vmem>>, vector<1x8x4xbf16>
    %64 = vector.shape_cast %63 : vector<1x8x4xbf16> to vector<8x4xbf16>
    %cst_26 = arith.constant dense<0.000000e+00> : vector<8x256xf32>
    %65 = tpu.matmul %64, %62, %cst_26 {dimension_numbers = #tpu.dot_dimension_numbers<[1], [0], [0], [1], [0, 0, 1, 1], [], []>} : vector<8x4xbf16>, vector<4x256xbf16>, vector<8x256xf32> -> vector<8x256xf32>
    %66 = arith.addf %48, %65 : vector<8x256xf32>
    %67 = vector.extract_strided_slice %4 {offsets = [0, 16], sizes = [4, 256], strides = [1, 1]} : vector<4x384xbf16> to vector<4x256xbf16>
    %c-1_i32_27 = arith.constant -1 : i32
    %68 = vector.broadcast %c-1_i32_27 : i32 to vector<1x256xi32>
    %69 = arith.addi %24, %68 : vector<1x256xi32>
    %c0_i32_28 = arith.constant 0 : i32
    %70 = vector.broadcast %c0_i32_28 : i32 to vector<1x256xi32>
    %71 = arith.cmpi sge, %69, %70 : vector<1x256xi32>
    %c-1_i32_29 = arith.constant -1 : i32
    %72 = vector.broadcast %c-1_i32_29 : i32 to vector<1x256xi32>
    %73 = arith.addi %24, %72 : vector<1x256xi32>
    %c16_i32_30 = arith.constant 16 : i32
    %74 = vector.broadcast %c16_i32_30 : i32 to vector<1x256xi32>
    %75 = arith.cmpi slt, %73, %74 : vector<1x256xi32>
    %76 = arith.andi %71, %75 : vector<1x256xi1>
    %cst_31 = arith.constant 0.000000e+00 : bf16
    %77 = vector.broadcast %cst_31 : bf16 to vector<4x256xbf16>
    %78 = vector.shape_cast %76 : vector<1x256xi1> to vector<1x256xi1>
    %79 = vector.broadcast %78 : vector<1x256xi1> to vector<4x256xi1>
    %80 = arith.select %79, %67, %77 : vector<4x256xi1>, vector<4x256xbf16>
    %c3 = arith.constant 3 : index
    %c0_32 = arith.constant 0 : index
    %c0_33 = arith.constant 0 : index
    %81 = vector.load %arg2[%c3, %c0_32, %c0_33] : memref<9x8x4xbf16, #tpu.memory_space<vmem>>, vector<1x8x4xbf16>
    %82 = vector.shape_cast %81 : vector<1x8x4xbf16> to vector<8x4xbf16>
    %cst_34 = arith.constant dense<0.000000e+00> : vector<8x256xf32>
    %83 = tpu.matmul %82, %80, %cst_34 {dimension_numbers = #tpu.dot_dimension_numbers<[1], [0], [0], [1], [0, 0, 1, 1], [], []>} : vector<8x4xbf16>, vector<4x256xbf16>, vector<8x256xf32> -> vector<8x256xf32>
    %84 = arith.addf %66, %83 : vector<8x256xf32>
    %85 = vector.extract_strided_slice %4 {offsets = [0, 17], sizes = [4, 256], strides = [1, 1]} : vector<4x384xbf16> to vector<4x256xbf16>
    %c4 = arith.constant 4 : index
    %c0_35 = arith.constant 0 : index
    %c0_36 = arith.constant 0 : index
    %86 = vector.load %arg2[%c4, %c0_35, %c0_36] : memref<9x8x4xbf16, #tpu.memory_space<vmem>>, vector<1x8x4xbf16>
    %87 = vector.shape_cast %86 : vector<1x8x4xbf16> to vector<8x4xbf16>
    %cst_37 = arith.constant dense<0.000000e+00> : vector<8x256xf32>
    %88 = tpu.matmul %87, %85, %cst_37 {dimension_numbers = #tpu.dot_dimension_numbers<[1], [0], [0], [1], [0, 0, 1, 1], [], []>} : vector<8x4xbf16>, vector<4x256xbf16>, vector<8x256xf32> -> vector<8x256xf32>
    %89 = arith.addf %84, %88 : vector<8x256xf32>
    %90 = vector.extract_strided_slice %4 {offsets = [0, 18], sizes = [4, 256], strides = [1, 1]} : vector<4x384xbf16> to vector<4x256xbf16>
    %c1_i32_38 = arith.constant 1 : i32
    %91 = vector.broadcast %c1_i32_38 : i32 to vector<1x256xi32>
    %92 = arith.addi %24, %91 : vector<1x256xi32>
    %c0_i32_39 = arith.constant 0 : i32
    %93 = vector.broadcast %c0_i32_39 : i32 to vector<1x256xi32>
    %94 = arith.cmpi sge, %92, %93 : vector<1x256xi32>
    %c1_i32_40 = arith.constant 1 : i32
    %95 = vector.broadcast %c1_i32_40 : i32 to vector<1x256xi32>
    %96 = arith.addi %24, %95 : vector<1x256xi32>
    %c16_i32_41 = arith.constant 16 : i32
    %97 = vector.broadcast %c16_i32_41 : i32 to vector<1x256xi32>
    %98 = arith.cmpi slt, %96, %97 : vector<1x256xi32>
    %99 = arith.andi %94, %98 : vector<1x256xi1>
    %cst_42 = arith.constant 0.000000e+00 : bf16
    %100 = vector.broadcast %cst_42 : bf16 to vector<4x256xbf16>
    %101 = vector.shape_cast %99 : vector<1x256xi1> to vector<1x256xi1>
    %102 = vector.broadcast %101 : vector<1x256xi1> to vector<4x256xi1>
    %103 = arith.select %102, %90, %100 : vector<4x256xi1>, vector<4x256xbf16>
    %c5 = arith.constant 5 : index
    %c0_43 = arith.constant 0 : index
    %c0_44 = arith.constant 0 : index
    %104 = vector.load %arg2[%c5, %c0_43, %c0_44] : memref<9x8x4xbf16, #tpu.memory_space<vmem>>, vector<1x8x4xbf16>
    %105 = vector.shape_cast %104 : vector<1x8x4xbf16> to vector<8x4xbf16>
    %cst_45 = arith.constant dense<0.000000e+00> : vector<8x256xf32>
    %106 = tpu.matmul %105, %103, %cst_45 {dimension_numbers = #tpu.dot_dimension_numbers<[1], [0], [0], [1], [0, 0, 1, 1], [], []>} : vector<8x4xbf16>, vector<4x256xbf16>, vector<8x256xf32> -> vector<8x256xf32>
    %107 = arith.addf %89, %106 : vector<8x256xf32>
    %108 = vector.extract_strided_slice %4 {offsets = [0, 32], sizes = [4, 256], strides = [1, 1]} : vector<4x384xbf16> to vector<4x256xbf16>
    %c-1_i32_46 = arith.constant -1 : i32
    %109 = vector.broadcast %c-1_i32_46 : i32 to vector<1x256xi32>
    %110 = arith.addi %24, %109 : vector<1x256xi32>
    %c0_i32_47 = arith.constant 0 : i32
    %111 = vector.broadcast %c0_i32_47 : i32 to vector<1x256xi32>
    %112 = arith.cmpi sge, %110, %111 : vector<1x256xi32>
    %c-1_i32_48 = arith.constant -1 : i32
    %113 = vector.broadcast %c-1_i32_48 : i32 to vector<1x256xi32>
    %114 = arith.addi %24, %113 : vector<1x256xi32>
    %c16_i32_49 = arith.constant 16 : i32
    %115 = vector.broadcast %c16_i32_49 : i32 to vector<1x256xi32>
    %116 = arith.cmpi slt, %114, %115 : vector<1x256xi32>
    %117 = arith.andi %112, %116 : vector<1x256xi1>
    %cst_50 = arith.constant 0.000000e+00 : bf16
    %118 = vector.broadcast %cst_50 : bf16 to vector<4x256xbf16>
    %119 = vector.shape_cast %117 : vector<1x256xi1> to vector<1x256xi1>
    %120 = vector.broadcast %119 : vector<1x256xi1> to vector<4x256xi1>
    %121 = arith.select %120, %108, %118 : vector<4x256xi1>, vector<4x256xbf16>
    %c6 = arith.constant 6 : index
    %c0_51 = arith.constant 0 : index
    %c0_52 = arith.constant 0 : index
    %122 = vector.load %arg2[%c6, %c0_51, %c0_52] : memref<9x8x4xbf16, #tpu.memory_space<vmem>>, vector<1x8x4xbf16>
    %123 = vector.shape_cast %122 : vector<1x8x4xbf16> to vector<8x4xbf16>
    %cst_53 = arith.constant dense<0.000000e+00> : vector<8x256xf32>
    %124 = tpu.matmul %123, %121, %cst_53 {dimension_numbers = #tpu.dot_dimension_numbers<[1], [0], [0], [1], [0, 0, 1, 1], [], []>} : vector<8x4xbf16>, vector<4x256xbf16>, vector<8x256xf32> -> vector<8x256xf32>
    %125 = arith.addf %107, %124 : vector<8x256xf32>
    %126 = vector.extract_strided_slice %4 {offsets = [0, 33], sizes = [4, 256], strides = [1, 1]} : vector<4x384xbf16> to vector<4x256xbf16>
    %c7 = arith.constant 7 : index
    %c0_54 = arith.constant 0 : index
    %c0_55 = arith.constant 0 : index
    %127 = vector.load %arg2[%c7, %c0_54, %c0_55] : memref<9x8x4xbf16, #tpu.memory_space<vmem>>, vector<1x8x4xbf16>
    %128 = vector.shape_cast %127 : vector<1x8x4xbf16> to vector<8x4xbf16>
    %cst_56 = arith.constant dense<0.000000e+00> : vector<8x256xf32>
    %129 = tpu.matmul %128, %126, %cst_56 {dimension_numbers = #tpu.dot_dimension_numbers<[1], [0], [0], [1], [0, 0, 1, 1], [], []>} : vector<8x4xbf16>, vector<4x256xbf16>, vector<8x256xf32> -> vector<8x256xf32>
    %130 = arith.addf %125, %129 : vector<8x256xf32>
    %131 = vector.extract_strided_slice %4 {offsets = [0, 34], sizes = [4, 256], strides = [1, 1]} : vector<4x384xbf16> to vector<4x256xbf16>
    %c1_i32_57 = arith.constant 1 : i32
    %132 = vector.broadcast %c1_i32_57 : i32 to vector<1x256xi32>
    %133 = arith.addi %24, %132 : vector<1x256xi32>
    %c0_i32_58 = arith.constant 0 : i32
    %134 = vector.broadcast %c0_i32_58 : i32 to vector<1x256xi32>
    %135 = arith.cmpi sge, %133, %134 : vector<1x256xi32>
    %c1_i32_59 = arith.constant 1 : i32
    %136 = vector.broadcast %c1_i32_59 : i32 to vector<1x256xi32>
    %137 = arith.addi %24, %136 : vector<1x256xi32>
    %c16_i32_60 = arith.constant 16 : i32
    %138 = vector.broadcast %c16_i32_60 : i32 to vector<1x256xi32>
    %139 = arith.cmpi slt, %137, %138 : vector<1x256xi32>
    %140 = arith.andi %135, %139 : vector<1x256xi1>
    %cst_61 = arith.constant 0.000000e+00 : bf16
    %141 = vector.broadcast %cst_61 : bf16 to vector<4x256xbf16>
    %142 = vector.shape_cast %140 : vector<1x256xi1> to vector<1x256xi1>
    %143 = vector.broadcast %142 : vector<1x256xi1> to vector<4x256xi1>
    %144 = arith.select %143, %131, %141 : vector<4x256xi1>, vector<4x256xbf16>
    %c8 = arith.constant 8 : index
    %c0_62 = arith.constant 0 : index
    %c0_63 = arith.constant 0 : index
    %145 = vector.load %arg2[%c8, %c0_62, %c0_63] : memref<9x8x4xbf16, #tpu.memory_space<vmem>>, vector<1x8x4xbf16>
    %146 = vector.shape_cast %145 : vector<1x8x4xbf16> to vector<8x4xbf16>
    %cst_64 = arith.constant dense<0.000000e+00> : vector<8x256xf32>
    %147 = tpu.matmul %146, %144, %cst_64 {dimension_numbers = #tpu.dot_dimension_numbers<[1], [0], [0], [1], [0, 0, 1, 1], [], []>} : vector<8x4xbf16>, vector<4x256xbf16>, vector<8x256xf32> -> vector<8x256xf32>
    %148 = arith.addf %130, %147 : vector<8x256xf32>
    %c0_65 = arith.constant 0 : index
    %c0_66 = arith.constant 0 : index
    %149 = vector.load %arg3[%c0_65, %c0_66] : memref<8x1xf32, #tpu.memory_space<vmem>>, vector<8x1xf32>
    %150 = vector.broadcast %149 : vector<8x1xf32> to vector<8x256xf32>
    %151 = arith.addf %148, %150 : vector<8x256xf32>
    %cst_67 = arith.constant 0.000000e+00 : f32
    %152 = vector.broadcast %cst_67 : f32 to vector<8x256xf32>
    %153 = arith.cmpf oge, %151, %152 : vector<8x256xf32>
    %cst_68 = arith.constant 2.000000e-01 : f32
    %154 = vector.broadcast %cst_68 : f32 to vector<8x256xf32>
    %155 = arith.mulf %154, %151 : vector<8x256xf32>
    %156 = arith.select %153, %151, %155 : vector<8x256xi1>, vector<8x256xf32>
    %c0_69 = arith.constant 0 : index
    %c0_70 = arith.constant 0 : index
    %c0_71 = arith.constant 0 : index
    %157 = vector.load %arg6[%c0_69, %c0_70, %c0_71] : memref<1x8x256xf32, #tpu.memory_space<vmem>>, vector<1x8x256xf32>
    %158 = vector.shape_cast %157 : vector<1x8x256xf32> to vector<8x256xf32>
    %159 = vector.shape_cast %156 : vector<8x256xf32> to vector<1x8x256xf32>
    tpu.vector_store %arg6[%c0_69, %c0_70, %c0_71], %159 {strides = array<i32>} : memref<1x8x256xf32, #tpu.memory_space<vmem>>, vector<1x8x256xf32>,
    return
  }
  func.func @transform_0(%arg0: i32, %arg1: i32) -> (i32, i32, i32) {
    %c0_i32 = arith.constant 0 : i32
    %c0_i32_0 = arith.constant 0 : i32
    %c0_i32_1 = arith.constant 0 : i32
    %c0_i32_2 = arith.constant 0 : i32
    return %c0_i32, %c0_i32_0, %c0_i32_1 : i32, i32, i32
  }
  func.func @transform_1(%arg0: i32, %arg1: i32) -> (i32, i32) {
    %c0_i32 = arith.constant 0 : i32
    %c0_i32_0 = arith.constant 0 : i32
    %c0_i32_1 = arith.constant 0 : i32
    return %c0_i32, %c0_i32_0 : i32, i32
  }
  func.func @transform_2(%arg0: i32, %arg1: i32) -> (i32, i32, i32) {
    %c0_i32 = arith.constant 0 : i32
    %c0_i32_0 = arith.constant 0 : i32
    return %arg0, %c0_i32, %arg1 : i32, i32, i32
  }
  func.func @transform_3(%arg0: i32, %arg1: i32) -> (i32, i32, i32) {
    %c1_i32 = arith.constant 1 : i32
    %0 = arith.addi %arg1, %c1_i32 : i32
    %c2_i32 = arith.constant 2 : i32
    %1 = arith.muli %0, %c2_i32 : i32
    %c0_i32 = arith.constant 0 : i32
    %c0_i32_0 = arith.constant 0 : i32
    return %arg0, %c0_i32, %1 : i32, i32, i32
  }
  func.func @transform_4(%arg0: i32, %arg1: i32) -> (i32, i32, i32) {
    %c0_i32 = arith.constant 0 : i32
    %c0_i32_0 = arith.constant 0 : i32
    return %arg0, %c0_i32, %arg1 : i32, i32, i32
  }
}

</mosaic_0001>

<llo_original>
// kernel: tpu_custom_call.1
$region0: #{tpu_custom_call.1}
  #allocation0 [shape = 'u32[]', space=smem, size = 0x4, offset = 0x4, fixed_abs, tag = 'smem constant byte address 0x4 - core index']
  #allocation1 [shape = 'u32[144,128]{1,0:T(1,128)}', space=vmem, size = 0x12000, scoped, tag = 'internal scratch']
  %s0 = inlined_call_operand.vmem [shape: bf16[9,8,4], index: 0, kind: input, shape index: {}]
  %s1 = inlined_call_operand.vmem [shape: f32[8,1], index: 1, kind: input, shape index: {}]
  %s2 = inlined_call_operand.vmem [shape: bf16[2,4,384], index: 2, kind: input, shape index: {}]
  %s3 = inlined_call_operand.vmem [shape: bf16[2,4,384], index: 3, kind: input, shape index: {}]
  %s4 = inlined_call_operand.hbm [shape: f32[2,8,256], index: 4, kind: output, shape index: {}]
  %s5 = sld [smem:[#allocation0]]
  $region49: #{tpu_custom_call.1} parent=0
    _
  %s7 = ssub.s32 1, %s5
  %s8 = scalar_select 0, %s7, %s5
  $region1: #{tpu_custom_call.1} parent=0
    #allocation2 [shape = 'u8[16384]{0}', space=vmem, size = 0x4000, scoped, tag = 'output window, operand 0']
    #allocation3 [shape = 's32[2]{0}', space=sflag, size = 0x8, scoped, tag = 'scoped memory for tpu_custom_call.1']
    %9 = vsyncpa [#allocation3], 0
    %s10 = scalar_lea.sflag [#allocation3], 1
    %11 = vsyncpa %s10, 0
    loop: start=0, step=1, limit=4
    $region2: #{tpu_custom_call.1} parent=1 // loop_pre_header
      _
    $region3: #{tpu_custom_call.1} parent=1 // loop_header
      %s13 = sphi 0, %s17
      %p14 = scmp.ge.s32.totalorder %s13, 4
      %s20 = sphi 0, %s32
      %s21 = sphi 0, %s28
      %s22 = sphi 0, %s20
      %s23 = sphi 0, %s21
      %s24 = sphi 0, %s22
      %s25 = sphi 0, %s23
      %s33 = sphi 0, %s33
      %s35 = sphi 0, %s33
      %s36 = sphi 0, %s35
      %s50 = sphi 0, %s36
      %s54 = sphi 0, %s54
      %s56 = sphi 0, %s54
      %s57 = sphi 0, %s56
      %s71 = sphi 0, %s57
      %s79 = sphi 0, %s81
      %s82 = sphi 0, %s79
      %s83 = sphi 0, %s82
      %s99 = sphi 0, %s83
      %s111 = sphi 0, %s113
      %s114 = sphi 0, %s111
      %s115 = sphi 0, %s114
      %s131 = sphi 0, %s115
      %s139 = sphi 0, %s141
      %s142 = sphi 0, %s139
      %s143 = sphi 0, %s142
      %s159 = sphi 0, %s143
    $region4: #{tpu_custom_call.1} parent=1 // loop_header_branch
      %16 = sbr.rel (%p14) target = $region8
    $region5: #{tpu_custom_call.1} parent=1 // loop_body
      %s18 = ssub.s32 %s13, 1
      %s19 = ssub.s32 %s13, 2
      %s26 = sadd.s32 1, %s21
      %p27 = scmp.ge.s32.totalorder %s26, 1
      %s28 = scalar_select %p27, 0, %s26
      %s29 = sadd.s32 1, %s20
      %s30 = scalar_select %p27, %s29, %s20
      %p31 = scmp.ge.s32.totalorder %s30, 2
      %s32 = scalar_select %p31, 0, %s30
      %s34 = sadd.s32 %s33, 1
      %p37 = scmp.eq.s32.totalorder %s13, 1
      %p38 = scmp.ne.s32.totalorder %s33, %s35
      %p39 = scmp.eq.s32.totalorder %s13, 0
      %p40 = por %p38, %p39
      %p41 = scmp.ne.s32.totalorder %s33, %s35
      %p42 = scmp.eq.s32.totalorder %s18, 1
      %p43 = por %p41, %p42
      %p44 = scmp.ne.s32.totalorder %s35, %s36
      %p45 = scmp.eq.s32.totalorder %s18, 0
      %p46 = por %p44, %p45
      %p47 = scmp.ne.s32.totalorder %s35, %s36
      %p48 = scmp.eq.s32.totalorder %s19, 1
      %p49 = por %p47, %p48
      %p51 = scmp.ne.s32.totalorder %s36, %s50
      %p52 = scmp.eq.s32.totalorder %s19, 0
      %p53 = por %p51, %p52
      %s55 = sadd.s32 %s54, 1
      %p58 = scmp.eq.s32.totalorder %s13, 1
      %p59 = scmp.ne.s32.totalorder %s54, %s56
      %p60 = scmp.eq.s32.totalorder %s13, 0
      %p61 = por %p59, %p60
      %p62 = scmp.ne.s32.totalorder %s54, %s56
      %p63 = scmp.eq.s32.totalorder %s18, 1
      %p64 = por %p62, %p63
      %p65 = scmp.ne.s32.totalorder %s56, %s57
      %p66 = scmp.eq.s32.totalorder %s18, 0
      %p67 = por %p65, %p66
      %p68 = scmp.ne.s32.totalorder %s56, %s57
      %p69 = scmp.eq.s32.totalorder %s19, 1
      %p70 = por %p68, %p69
      %p72 = scmp.ne.s32.totalorder %s57, %s71
      %p73 = scmp.eq.s32.totalorder %s19, 0
      %p74 = por %p72, %p73
      %s75 = ssub.s32 %s20, %s32
      %s76 = ssub.s32 %s21, %s28
      %s77 = sor.u32 %s75, %s76
      %p78 = scmp.eq.s32.totalorder %s77, 0
      %s80 = sadd.s32 %s79, 1
      %s81 = scalar_select %p78, %s79, %s80
      %p84 = pneg %p78
      %p85 = scmp.eq.s32.totalorder %s13, 1
      %p86 = por %p84, %p85
      %p87 = scmp.ne.s32.totalorder %s79, %s82
      %p88 = scmp.eq.s32.totalorder %s13, 0
      %p89 = por %p87, %p88
      %p90 = scmp.ne.s32.totalorder %s79, %s82
      %p91 = scmp.eq.s32.totalorder %s18, 1
      %p92 = por %p90, %p91
      %p93 = scmp.ne.s32.totalorder %s82, %s83
      %p94 = scmp.eq.s32.totalorder %s18, 0
      %p95 = por %p93, %p94
      %p96 = scmp.ne.s32.totalorder %s82, %s83
      %p97 = scmp.eq.s32.totalorder %s19, 1
      %p98 = por %p96, %p97
      %p100 = scmp.ne.s32.totalorder %s83, %s99
      %p101 = scmp.eq.s32.totalorder %s19, 0
      %p102 = por %p100, %p101
      %s103 = sadd.s32 %s21, 1
      %s104 = smul.u32 %s103, 2
      %s105 = sadd.s32 %s28, 1
      %s106 = smul.u32 %s105, 2
      %s107 = ssub.s32 %s20, %s32
      %s108 = ssub.s32 %s104, %s106
      %s109 = sor.u32 %s107, %s108
      %p110 = scmp.eq.s32.totalorder %s109, 0
      %s112 = sadd.s32 %s111, 1
      %s113 = scalar_select %p110, %s111, %s112
      %p116 = pneg %p110
      %p117 = scmp.eq.s32.totalorder %s13, 1
      %p118 = por %p116, %p117
      %p119 = scmp.ne.s32.totalorder %s111, %s114
      %p120 = scmp.eq.s32.totalorder %s13, 0
      %p121 = por %p119, %p120
      %p122 = scmp.ne.s32.totalorder %s111, %s114
      %p123 = scmp.eq.s32.totalorder %s18, 1
      %p124 = por %p122, %p123
      %p125 = scmp.ne.s32.totalorder %s114, %s115
      %p126 = scmp.eq.s32.totalorder %s18, 0
      %p127 = por %p125, %p126
      %p128 = scmp.ne.s32.totalorder %s114, %s115
      %p129 = scmp.eq.s32.totalorder %s19, 1
      %p130 = por %p128, %p129
      %p132 = scmp.ne.s32.totalorder %s115, %s131
      %p133 = scmp.eq.s32.totalorder %s19, 0
      %p134 = por %p132, %p133
      %s135 = ssub.s32 %s20, %s32
      %s136 = ssub.s32 %s21, %s28
      %s137 = sor.u32 %s135, %s136
      %p138 = scmp.eq.s32.totalorder %s137, 0
      %s140 = sadd.s32 %s139, 1
      %s141 = scalar_select %p138, %s139, %s140
      %p144 = pneg %p138
      %p145 = scmp.eq.s32.totalorder %s13, 1
      %p146 = por %p144, %p145
      %p147 = scmp.ne.s32.totalorder %s139, %s142
      %p148 = scmp.eq.s32.totalorder %s13, 0
      %p149 = por %p147, %p148
      %p150 = scmp.ne.s32.totalorder %s139, %s142
      %p151 = scmp.eq.s32.totalorder %s18, 1
      %p152 = por %p150, %p151
      %p153 = scmp.ne.s32.totalorder %s142, %s143
      %p154 = scmp.eq.s32.totalorder %s18, 0
      %p155 = por %p153, %p154
      %p156 = scmp.ne.s32.totalorder %s142, %s143
      %p157 = scmp.eq.s32.totalorder %s19, 1
      %p158 = por %p156, %p157
      %p160 = scmp.ne.s32.totalorder %s143, %s159
      %p161 = scmp.eq.s32.totalorder %s19, 0
      %p162 = por %p160, %p161
      %p163 = scmp.le.s32.totalorder 1, %s13
      %p164 = scmp.lt.s32.totalorder %s13, 3
      %p165 = pnand %p163, %p164
      %p166 = pneg %p165
      // Predicated region
      $region9: #{tpu_custom_call.1} parent=5 // pred_check
        _
      $region10: #{tpu_custom_call.1} parent=5 // pred_check_branch
        %168 = sbr.rel (%p165) target = $region12
      $region11: #{tpu_custom_call.1} parent=5 // pred_region
        %s169 = ssub.s32 %s13, 1
        // Predicated region
        $region13: #{tpu_custom_call.1} parent=11 // pred_check
          %p170 = pneg %p46
        $region14: #{tpu_custom_call.1} parent=11 // pred_check_branch
          %172 = sbr.rel (%p170) target = $region16
        $region15: #{tpu_custom_call.1} parent=11 // pred_region
          _
        $region16: #{tpu_custom_call.1} parent=11 // pred_fallthru
          _
        // Predicated region
        $region17: #{tpu_custom_call.1} parent=11 // pred_check
          %p173 = pneg %p67
        $region18: #{tpu_custom_call.1} parent=11 // pred_check_branch
          %175 = sbr.rel (%p173) target = $region20
        $region19: #{tpu_custom_call.1} parent=11 // pred_region
          _
        $region20: #{tpu_custom_call.1} parent=11 // pred_fallthru
          _
      $region12: #{tpu_custom_call.1} parent=5 // pred_fallthru
        _
      %p176 = scmp.lt.s32.totalorder %s13, 2
      // Predicated region
      $region21: #{tpu_custom_call.1} parent=5 // pred_check
        %p177 = pneg %p176
      $region22: #{tpu_custom_call.1} parent=5 // pred_check_branch
        %179 = sbr.rel (%p177) target = $region24
      $region23: #{tpu_custom_call.1} parent=5 // pred_region
        // Predicated region
        $region25: #{tpu_custom_call.1} parent=23 // pred_check
          %p180 = pneg %p89
        $region26: #{tpu_custom_call.1} parent=23 // pred_check_branch
          %182 = sbr.rel (%p180) target = $region28
        $region27: #{tpu_custom_call.1} parent=23 // pred_region
          %s183 = smul.u32 2, %s21
          %s184 = ssub.s32 3, %s183
          %p185 = scmp.lt.s32.totalorder %s184, 2
          %s186 = scalar_select %p185, %s184, 2
          %s187 = smul.u32 32, %s186
          %p188 = scmp.lt.s32.totalorder %s20, 1
          %s189 = scalar_select %p188, %s20, 1
          %p190 = scmp.lt.s32.totalorder %s183, 2
          %s191 = scalar_select %p190, %s183, 2
          %s192 = smul.addr %s189, 3
          %s193 = sadd.s32 %s191, %s192
          %s194 = smul.addr %s193, 2
          %s195 = scalar_lea.vmem %s2, %s194
          %s196 = smul.u32 2, %s21
          %s197 = ssub.s32 3, %s196
          %p198 = scmp.lt.s32.totalorder %s197, 2
          %s199 = scalar_select %p198, %s197, 2
          %s200 = smul.u32 32, %s199
        $region28: #{tpu_custom_call.1} parent=23 // pred_fallthru
          _
        // Predicated region
        $region29: #{tpu_custom_call.1} parent=23 // pred_check
          %p201 = pneg %p121
        $region30: #{tpu_custom_call.1} parent=23 // pred_check_branch
          %203 = sbr.rel (%p201) target = $region32
        $region31: #{tpu_custom_call.1} parent=23 // pred_region
          %s204 = sadd.s32 %s21, 1
          %s205 = smul.u32 %s204, 2
          %p206 = scmp.lt.s32.totalorder %s20, 1
          %s207 = scalar_select %p206, %s20, 1
          %p208 = scmp.lt.s32.totalorder %s205, 2
          %s209 = scalar_select %p208, %s205, 2
          %s210 = smul.addr %s207, 3
          %s211 = sadd.s32 %s209, %s210
          %s212 = smul.addr %s211, 2
          %s213 = scalar_lea.vmem %s3, %s212
          %s214 = sadd.s32 %s21, 1
          %s215 = smul.u32 %s214, 2
        $region32: #{tpu_custom_call.1} parent=23 // pred_fallthru
          _
      $region24: #{tpu_custom_call.1} parent=5 // pred_fallthru
        _
      %p216 = scmp.le.s32.totalorder 1, %s13
      %p217 = scmp.lt.s32.totalorder %s13, 3
      %p218 = pnand %p216, %p217
      %p219 = pneg %p218
      // Predicated region
      $region33: #{tpu_custom_call.1} parent=5 // pred_check
        _
      $region34: #{tpu_custom_call.1} parent=5 // pred_check_branch
        %221 = sbr.rel (%p218) target = $region36
      $region35: #{tpu_custom_call.1} parent=5 // pred_region
        %s222 = ssub.s32 %s13, 1
        %p223 = pneg %p46
        %p224 = pneg %p43
        %p225 = pneg %p67
        %p226 = pneg %p64
        %s227 = smul.u32 2, %s23
        %s228 = ssub.s32 3, %s227
        %p229 = scmp.lt.s32.totalorder %s228, 2
        %s230 = scalar_select %p229, %s228, 2
        %s231 = smul.u32 32, %s230
        %p232 = scmp.lt.s32.totalorder %s22, 1
        %s233 = scalar_select %p232, %s22, 1
        %p234 = scmp.lt.s32.totalorder %s227, 2
        %s235 = scalar_select %p234, %s227, 2
        %s236 = smul.addr %s233, 3
        %s237 = sadd.s32 %s235, %s236
        %s238 = smul.addr %s237, 2
        %s239 = scalar_lea.vmem %s2, %s238
        %p240 = pneg %p95
        %p241 = pneg %p92
        %s242 = sadd.s32 %s23, 1
        %s243 = smul.u32 %s242, 2
        %p244 = scmp.lt.s32.totalorder %s22, 1
        %s245 = scalar_select %p244, %s22, 1
        %p246 = scmp.lt.s32.totalorder %s243, 2
        %s247 = scalar_select %p246, %s243, 2
        %s248 = smul.addr %s245, 3
        %s249 = sadd.s32 %s247, %s248
        %s250 = smul.addr %s249, 2
        %s251 = scalar_lea.vmem %s3, %s250
        %p252 = pneg %p127
        %p253 = pneg %p124
        %p254 = pneg %p155
        %p255 = pneg %p152
        %s256 = sand.u32 %s142, 1
        %s257 = scalar_lea.sflag [#allocation3], %s256
        %s258 = sand.u32 %s142, 1
        %s259 = smul.addr %s258, 16
        %s260 = scalar_lea.vmem [#allocation2], %s259
        %s261 = smul.u32 2, %s23
        %s262 = ssub.s32 3, %s261
        %p263 = scmp.lt.s32.totalorder %s262, 2
        %s264 = scalar_select %p263, %s262, 2
        %s265 = smul.u32 32, %s264
        %p266 = scmp.lt.s32.totalorder %s22, 1
        %s267 = scalar_select %p266, %s22, 1
        %p268 = scmp.lt.s32.totalorder %s261, 2
        %s269 = scalar_select %p268, %s261, 2
        %s270 = smul.addr %s267, 3
        %s271 = sadd.s32 %s269, %s270
        %s272 = smul.addr %s271, 2
        %s273 = scalar_lea.vmem %s2, %s272
        %s274 = smul.u32 2, %s23
        %s275 = ssub.s32 3, %s274
        %p276 = scmp.lt.s32.totalorder %s275, 2
        %s277 = scalar_select %p276, %s275, 2
        %s278 = smul.u32 32, %s277
        %s279 = sadd.s32 %s23, 1
        %s280 = smul.u32 %s279, 2
        %p281 = scmp.lt.s32.totalorder %s22, 1
        %s282 = scalar_select %p281, %s22, 1
        %p283 = scmp.lt.s32.totalorder %s280, 2
        %s284 = scalar_select %p283, %s280, 2
        %s285 = smul.addr %s282, 3
        %s286 = sadd.s32 %s284, %s285
        %s287 = smul.addr %s286, 2
        %s288 = scalar_lea.vmem %s3, %s287
        %s289 = sadd.s32 %s23, 1
        %s290 = smul.u32 %s289, 2
        %s291 = smul.u32 2, %s23
        %v295 = vld [vmem:[%s273] sm:$0xf]
        %v296 = vld [vmem:[%s288] sm:$0x3]
        %v299 = vunpack.c.l.s4 1983009808
        %v300 = vunpack.c.0.s8 %v299
        %v301 = vlaneseq
        %v302 = vshrl.u32 %v301, 7
        %v303 = vsub.s32 %v300, %v302
        %v304 = vrot.slane %v295, %v303
        %v305 = vcombine.high %v304, %v304
        %s308 = smul.u32 %s23, 256
        %v309 = vlaneseq
        %v310 = vand.u32 %v309, 127
        %v311 = vadd.s32 %v310, 128
        %v312 = vstv %s308
        %v313 = vadd.s32 %v312, %v310
        %v314 = vadd.s32 %v312, %v311
        %vm315 = vcmp.lt.s32.totalorder %v313, 0
        %v316 = vsub.s32 0, %v313
        %v317 = vsel %vm315, %v316, %v313
        %v318 = vshrl.u32 %v317, 4
        %v319 = vand.u32 %v317, 15
        %v320 = vsub.s32 0, %v319
        %v321 = vsel %vm315, %v320, %v319
        %vm322 = vcmp.lt.s32.totalorder %v314, 0
        %v323 = vsub.s32 0, %v314
        %v324 = vsel %vm322, %v323, %v314
        %v325 = vshrl.u32 %v324, 4
        %v326 = vand.u32 %v324, 15
        %v327 = vsub.s32 0, %v326
        %v328 = vsel %vm322, %v327, %v326
        %vm329 = vcmp.ne.s32.totalorder %v321, 0
        %vm330 = vcmp.ne.s32.totalorder %v328, 0
        %vm331 = vcmp.lt.s32.totalorder %v321, 0
        %vm332 = vcmp.lt.s32.totalorder %v328, 0
        %vm333 = vmand %vm331, %vm329
        %vm334 = vmand %vm332, %vm330
        %v335 = vadd.s32 %v321, 16
        %v336 = vadd.s32 %v328, 16
        %v337 = vsel %vm333, %v335, %v321
        %v338 = vsel %vm334, %v336, %v328
        %v339 = vadd.s32 %v337, 4294967295
        %v340 = vadd.s32 %v338, 4294967295
        %vm341 = vcmp.ge.s32.totalorder %v339, 0
        %vm342 = vcmp.ge.s32.totalorder %v340, 0
        %vm343 = vcmp.lt.s32.totalorder %v339, 16
        %vm344 = vcmp.lt.s32.totalorder %v340, 16
        %vm345 = vmand %vm341, %vm343
        %vm346 = vmand %vm342, %vm344
        %v347 = vsel %vm345, 1, 0
        %v348 = vsel %vm346, 1, 0
        %vm349 = vcmp.eq.s32.totalorder %v347, 1
        %vm350 = vcmp.eq.s32.totalorder %v348, 1
        %vm351 = vmpackc.low %vm350, %vm349
        %v352 = vsel %vm351, 65537, 0
        %v353 = vlaneseq
        %v354 = vshrl.u32 %v353, 7
        %v355 = vsub.s32 0, %v354
        %v356 = vrot.slane %v352, %v355
        %v357 = vlaneseq
        %v358 = vshrl.u32 %v357, 7
        %v359 = vsub.s32 4, %v358
        %v360 = vrot.slane %v352, %v359
        %vm361 = vcmp.ne.s16.totalorder %v356, 0
        %vm362 = vcmp.ne.s16.totalorder %v360, 0
        %v363 = vsel %vm361, %v304, 0
        %v364 = vsel %vm362, %v305, 0
        %v365 = vld [vmem:[%s0] sm:$0xf]
        %s366 = scalar_lea.vmem %s0, 4
        %v367 = vld [vmem:[%s366] sm:$0xf]
        %369 = vrot.lane.b32.xlu0 %v304, 127
        %v370 = vpop.permute.xlu0 %369
        %371 = vrot.lane.b32.xlu0 %v305, 127
        %v372 = vpop.permute.xlu0 %371
        %373 = vrot.lane.b32.xlu0 %v296, 127
        %v374 = vpop.permute.xlu0 %373
        %vm375 = vcmask 1039360
        %v376 = vsel %vm375, %v370, %v372
        %v377 = vsel %vm375, %v372, %v374
        %vm378 = vcmask 31744
        %v380 = vsel %vm378, %v367, 0
        %vm382 = vcmask 1041408
        %v384 = vsel %vm382, %v376, 0
        %v387 = vsel %vm382, %v377, 0
        %389 = vmatprep.subr.bf16.mxu0 0
        %390 = vmatpush1.bf16.msra.mxu0 0
        %391 = vmatprep.subr.bf16.mxu0 0
        %392 = vmatpush1.bf16.msra.mxu0 0
        %393 = vmatprep.subr.bf16.mxu0 0
        %394 = vmatpush1.bf16.msra.mxu0 0
        %395 = vmatprep.subr.bf16.mxu0 0
        %396 = vmatpush1.bf16.msra.mxu0 0
        %397 = vmatprep.subr.bf16.mxu0 0
        %398 = vmatpush1.bf16.msra.mxu0 0
        %399 = vmatprep.subr.bf16.mxu0 0
        %400 = vmatpush1.bf16.msra.mxu0 0
        %401 = vmatprep.subr.bf16.mxu0 0
        %402 = vmatpush1.bf16.msra.mxu0 0
        %403 = vmatprep.subr.bf16.mxu0 %v387
        %404 = vmatpush1.bf16.msra.mxu0 %v384
        %405 = vmatprep.subr.bf16.mxu0 0
        %406 = vmatpush2.bf16.msra.mxu0 0
        %407 = vmatprep.subr.bf16.mxu0 0
        %408 = vmatpush2.bf16.msra.mxu0 0
        %409 = vmatprep.subr.bf16.mxu0 0
        %410 = vmatpush2.bf16.msra.mxu0 0
        %411 = vmatprep.subr.bf16.mxu0 0
        %412 = vmatpush2.bf16.msra.mxu0 0
        %413 = vmatprep.subr.bf16.mxu0 0
        %414 = vmatpush2.bf16.msra.mxu0 0
        %415 = vmatprep.subr.bf16.mxu0 0
        %416 = vmatpush2.bf16.msra.mxu0 0
        %417 = vmatprep.subr.bf16.mxu0 0
        %418 = vmatpush2.bf16.msra.mxu0 0
        %419 = vmatprep.subr.bf16.mxu0 0
        %420 = vmatpush2.bf16.msra.mxu0 0
        %421 = vmatprep.mubr.bf16.mxu0 0
        %422 = vmatmul.mubr.bf16.gmra.mxu0 %v380
        %v423 = vpop.f32.mrf.mxu0
        %v424 = vadd.f32 0.0, %v423
        %v425 = vpop.f32.mrf.mxu0
        %v426 = vadd.f32 0.0, %v425
        %v427 = vpop.f32.mrf.mxu0
        %v428 = vpop.f32.mrf.mxu0
        %429 = vdwg.mxu0
        %v431 = vsel %vm378, %v365, 0
        %v434 = vsel %vm382, %v363, 0
        %v437 = vsel %vm382, %v364, 0
        %439 = vmatprep.subr.bf16.mxu0 0
        %440 = vmatpush1.bf16.msra.mxu0 0
        %441 = vmatprep.subr.bf16.mxu0 0
        %442 = vmatpush1.bf16.msra.mxu0 0
        %443 = vmatprep.subr.bf16.mxu0 0
        %444 = vmatpush1.bf16.msra.mxu0 0
        %445 = vmatprep.subr.bf16.mxu0 0
        %446 = vmatpush1.bf16.msra.mxu0 0
        %447 = vmatprep.subr.bf16.mxu0 0
        %448 = vmatpush1.bf16.msra.mxu0 0
        %449 = vmatprep.subr.bf16.mxu0 0
        %450 = vmatpush1.bf16.msra.mxu0 0
        %451 = vmatprep.subr.bf16.mxu0 0
        %452 = vmatpush1.bf16.msra.mxu0 0
        %453 = vmatprep.subr.bf16.mxu0 %v437
        %454 = vmatpush1.bf16.msra.mxu0 %v434
        %455 = vmatprep.subr.bf16.mxu0 0
        %456 = vmatpush2.bf16.msra.mxu0 0
        %457 = vmatprep.subr.bf16.mxu0 0
        %458 = vmatpush2.bf16.msra.mxu0 0
        %459 = vmatprep.subr.bf16.mxu0 0
        %460 = vmatpush2.bf16.msra.mxu0 0
        %461 = vmatprep.subr.bf16.mxu0 0
        %462 = vmatpush2.bf16.msra.mxu0 0
        %463 = vmatprep.subr.bf16.mxu0 0
        %464 = vmatpush2.bf16.msra.mxu0 0
        %465 = vmatprep.subr.bf16.mxu0 0
        %466 = vmatpush2.bf16.msra.mxu0 0
        %467 = vmatprep.subr.bf16.mxu0 0
        %468 = vmatpush2.bf16.msra.mxu0 0
        %469 = vmatprep.subr.bf16.mxu0 0
        %470 = vmatpush2.bf16.msra.mxu0 0
        %471 = vmatprep.mubr.bf16.mxu0 0
        %472 = vmatmul.mubr.bf16.gmra.mxu0 %v431
        %v473 = vpop.f32.mrf.mxu0
        %v474 = vadd.f32 %v424, %v473
        %v475 = vpop.f32.mrf.mxu0
        %v476 = vadd.f32 %v426, %v475
        %v477 = vpop.f32.mrf.mxu0
        %v478 = vpop.f32.mrf.mxu0
        %479 = vdwg.mxu0
        %v480 = vadd.s32 %v337, 1
        %v481 = vadd.s32 %v338, 1
        %vm482 = vcmp.ge.s32.totalorder %v480, 0
        %vm483 = vcmp.ge.s32.totalorder %v481, 0
        %vm484 = vcmp.lt.s32.totalorder %v480, 16
        %vm485 = vcmp.lt.s32.totalorder %v481, 16
        %vm486 = vmand %vm482, %vm484
        %vm487 = vmand %vm483, %vm485
        %v488 = vsel %vm486, 1, 0
        %v489 = vsel %vm487, 1, 0
        %vm490 = vcmp.eq.s32.totalorder %v488, 1
        %vm491 = vcmp.eq.s32.totalorder %v489, 1
        %vm492 = vmpackc.low %vm491, %vm490
        %v493 = vsel %vm492, 65537, 0
        %v494 = vlaneseq
        %v495 = vshrl.u32 %v494, 7
        %v496 = vsub.s32 0, %v495
        %v497 = vrot.slane %v493, %v496
        %v498 = vlaneseq
        %v499 = vshrl.u32 %v498, 7
        %v500 = vsub.s32 4, %v499
        %v501 = vrot.slane %v493, %v500
        %502 = vrot.lane.b32.xlu0 %v497, 2
        %v503 = vpop.permute.xlu0 %502
        %504 = vrot.lane.b32.xlu0 %v501, 2
        %v505 = vpop.permute.xlu0 %504
        %vm506 = vcmask 15360
        %v507 = vsel %vm506, %v503, %v505
        %vm508 = vcmp.ne.s16.totalorder %v503, 0
        %vm509 = vcmp.ne.s16.totalorder %v507, 0
        %vm510 = vcmp.ne.s16.totalorder %v505, 0
        %v511 = vsel %vm508, %v304, 0
        %v512 = vsel %vm509, %v305, 0
        %v513 = vsel %vm510, %v296, 0
        %s514 = scalar_lea.vmem %s0, 8
        %v515 = vld [vmem:[%s514] sm:$0xf]
        %519 = vrot.lane.b32.xlu0 %v511, 126
        %v520 = vpop.permute.xlu0 %519
        %521 = vrot.lane.b32.xlu0 %v512, 126
        %v522 = vpop.permute.xlu0 %521
        %523 = vrot.lane.b32.xlu0 %v513, 126
        %v524 = vpop.permute.xlu0 %523
        %vm525 = vcmask 1031168
        %v526 = vsel %vm525, %v520, %v522
        %v527 = vsel %vm525, %v522, %v524
        %v529 = vsel %vm378, %v515, 0
        %v532 = vsel %vm382, %v526, 0
        %v535 = vsel %vm382, %v527, 0
        %537 = vmatprep.subr.bf16.mxu0 0
        %538 = vmatpush1.bf16.msra.mxu0 0
        %539 = vmatprep.subr.bf16.mxu0 0
        %540 = vmatpush1.bf16.msra.mxu0 0
        %541 = vmatprep.subr.bf16.mxu0 0
        %542 = vmatpush1.bf16.msra.mxu0 0
        %543 = vmatprep.subr.bf16.mxu0 0
        %544 = vmatpush1.bf16.msra.mxu0 0
        %545 = vmatprep.subr.bf16.mxu0 0
        %546 = vmatpush1.bf16.msra.mxu0 0
        %547 = vmatprep.subr.bf16.mxu0 0
        %548 = vmatpush1.bf16.msra.mxu0 0
        %549 = vmatprep.subr.bf16.mxu0 0
        %550 = vmatpush1.bf16.msra.mxu0 0
        %551 = vmatprep.subr.bf16.mxu0 %v535
        %552 = vmatpush1.bf16.msra.mxu0 %v532
        %553 = vmatprep.subr.bf16.mxu0 0
        %554 = vmatpush2.bf16.msra.mxu0 0
        %555 = vmatprep.subr.bf16.mxu0 0
        %556 = vmatpush2.bf16.msra.mxu0 0
        %557 = vmatprep.subr.bf16.mxu0 0
        %558 = vmatpush2.bf16.msra.mxu0 0
        %559 = vmatprep.subr.bf16.mxu0 0
        %560 = vmatpush2.bf16.msra.mxu0 0
        %561 = vmatprep.subr.bf16.mxu0 0
        %562 = vmatpush2.bf16.msra.mxu0 0
        %563 = vmatprep.subr.bf16.mxu0 0
        %564 = vmatpush2.bf16.msra.mxu0 0
        %565 = vmatprep.subr.bf16.mxu0 0
        %566 = vmatpush2.bf16.msra.mxu0 0
        %567 = vmatprep.subr.bf16.mxu0 0
        %568 = vmatpush2.bf16.msra.mxu0 0
        %569 = vmatprep.mubr.bf16.mxu0 0
        %570 = vmatmul.mubr.bf16.gmra.mxu0 %v529
        %v571 = vpop.f32.mrf.mxu0
        %v572 = vadd.f32 0.0, %v571
        %v573 = vpop.f32.mrf.mxu0
        %v574 = vadd.f32 0.0, %v573
        %v575 = vpop.f32.mrf.mxu0
        %v576 = vpop.f32.mrf.mxu0
        %577 = vdwg.mxu0
        %v578 = vadd.f32 %v474, %v572
        %v579 = vadd.f32 %v476, %v574
        %580 = vrot.lane.b32.xlu0 %v356, 16
        %v581 = vpop.permute.xlu0 %580
        %582 = vrot.lane.b32.xlu0 %v360, 16
        %v583 = vpop.permute.xlu0 %582
        %vm584 = vcmask 130048
        %v585 = vsel %vm584, %v581, %v583
        %vm586 = vcmp.ne.s16.totalorder %v581, 0
        %vm587 = vcmp.ne.s16.totalorder %v585, 0
        %vm588 = vcmp.ne.s16.totalorder %v583, 0
        %v589 = vsel %vm586, %v304, 0
        %v590 = vsel %vm587, %v305, 0
        %v591 = vsel %vm588, %v296, 0
        %s592 = scalar_lea.vmem %s0, 12
        %v593 = vld [vmem:[%s592] sm:$0xf]
        %597 = vrot.lane.b32.xlu0 %v589, 112
        %v598 = vpop.permute.xlu0 %597
        %599 = vrot.lane.b32.xlu0 %v590, 112
        %v600 = vpop.permute.xlu0 %599
        %601 = vrot.lane.b32.xlu0 %v591, 112
        %v602 = vpop.permute.xlu0 %601
        %vm603 = vcmask 916480
        %v604 = vsel %vm603, %v598, %v600
        %v605 = vsel %vm603, %v600, %v602
        %v607 = vsel %vm378, %v593, 0
        %v610 = vsel %vm382, %v604, 0
        %v613 = vsel %vm382, %v605, 0
        %615 = vmatprep.subr.bf16.mxu0 0
        %616 = vmatpush1.bf16.msra.mxu0 0
        %617 = vmatprep.subr.bf16.mxu0 0
        %618 = vmatpush1.bf16.msra.mxu0 0
        %619 = vmatprep.subr.bf16.mxu0 0
        %620 = vmatpush1.bf16.msra.mxu0 0
        %621 = vmatprep.subr.bf16.mxu0 0
        %622 = vmatpush1.bf16.msra.mxu0 0
        %623 = vmatprep.subr.bf16.mxu0 0
        %624 = vmatpush1.bf16.msra.mxu0 0
        %625 = vmatprep.subr.bf16.mxu0 0
        %626 = vmatpush1.bf16.msra.mxu0 0
        %627 = vmatprep.subr.bf16.mxu0 0
        %628 = vmatpush1.bf16.msra.mxu0 0
        %629 = vmatprep.subr.bf16.mxu0 %v613
        %630 = vmatpush1.bf16.msra.mxu0 %v610
        %631 = vmatprep.subr.bf16.mxu0 0
        %632 = vmatpush2.bf16.msra.mxu0 0
        %633 = vmatprep.subr.bf16.mxu0 0
        %634 = vmatpush2.bf16.msra.mxu0 0
        %635 = vmatprep.subr.bf16.mxu0 0
        %636 = vmatpush2.bf16.msra.mxu0 0
        %637 = vmatprep.subr.bf16.mxu0 0
        %638 = vmatpush2.bf16.msra.mxu0 0
        %639 = vmatprep.subr.bf16.mxu0 0
        %640 = vmatpush2.bf16.msra.mxu0 0
        %641 = vmatprep.subr.bf16.mxu0 0
        %642 = vmatpush2.bf16.msra.mxu0 0
        %643 = vmatprep.subr.bf16.mxu0 0
        %644 = vmatpush2.bf16.msra.mxu0 0
        %645 = vmatprep.subr.bf16.mxu0 0
        %646 = vmatpush2.bf16.msra.mxu0 0
        %647 = vmatprep.mubr.bf16.mxu0 0
        %648 = vmatmul.mubr.bf16.gmra.mxu0 %v607
        %v649 = vpop.f32.mrf.mxu0
        %v650 = vadd.f32 0.0, %v649
        %v651 = vpop.f32.mrf.mxu0
        %v652 = vadd.f32 0.0, %v651
        %v653 = vpop.f32.mrf.mxu0
        %v654 = vpop.f32.mrf.mxu0
        %655 = vdwg.mxu0
        %v656 = vadd.f32 %v578, %v650
        %v657 = vadd.f32 %v579, %v652
        %s658 = scalar_lea.vmem %s0, 16
        %v659 = vld [vmem:[%s658] sm:$0xf]
        %660 = vrot.lane.b32.xlu0 %v304, 111
        %v661 = vpop.permute.xlu0 %660
        %662 = vrot.lane.b32.xlu0 %v305, 111
        %v663 = vpop.permute.xlu0 %662
        %664 = vrot.lane.b32.xlu0 %v296, 111
        %v665 = vpop.permute.xlu0 %664
        %vm666 = vcmask 908288
        %v667 = vsel %vm666, %v661, %v663
        %v668 = vsel %vm666, %v663, %v665
        %v670 = vsel %vm378, %v659, 0
        %v673 = vsel %vm382, %v667, 0
        %v676 = vsel %vm382, %v668, 0
        %678 = vmatprep.subr.bf16.mxu0 0
        %679 = vmatpush1.bf16.msra.mxu0 0
        %680 = vmatprep.subr.bf16.mxu0 0
        %681 = vmatpush1.bf16.msra.mxu0 0
        %682 = vmatprep.subr.bf16.mxu0 0
        %683 = vmatpush1.bf16.msra.mxu0 0
        %684 = vmatprep.subr.bf16.mxu0 0
        %685 = vmatpush1.bf16.msra.mxu0 0
        %686 = vmatprep.subr.bf16.mxu0 0
        %687 = vmatpush1.bf16.msra.mxu0 0
        %688 = vmatprep.subr.bf16.mxu0 0
        %689 = vmatpush1.bf16.msra.mxu0 0
        %690 = vmatprep.subr.bf16.mxu0 0
        %691 = vmatpush1.bf16.msra.mxu0 0
        %692 = vmatprep.subr.bf16.mxu0 %v676
        %693 = vmatpush1.bf16.msra.mxu0 %v673
        %694 = vmatprep.subr.bf16.mxu0 0
        %695 = vmatpush2.bf16.msra.mxu0 0
        %696 = vmatprep.subr.bf16.mxu0 0
        %697 = vmatpush2.bf16.msra.mxu0 0
        %698 = vmatprep.subr.bf16.mxu0 0
        %699 = vmatpush2.bf16.msra.mxu0 0
        %700 = vmatprep.subr.bf16.mxu0 0
        %701 = vmatpush2.bf16.msra.mxu0 0
        %702 = vmatprep.subr.bf16.mxu0 0
        %703 = vmatpush2.bf16.msra.mxu0 0
        %704 = vmatprep.subr.bf16.mxu0 0
        %705 = vmatpush2.bf16.msra.mxu0 0
        %706 = vmatprep.subr.bf16.mxu0 0
        %707 = vmatpush2.bf16.msra.mxu0 0
        %708 = vmatprep.subr.bf16.mxu0 0
        %709 = vmatpush2.bf16.msra.mxu0 0
        %710 = vmatprep.mubr.bf16.mxu0 0
        %711 = vmatmul.mubr.bf16.gmra.mxu0 %v670
        %v712 = vpop.f32.mrf.mxu0
        %v713 = vadd.f32 0.0, %v712
        %v714 = vpop.f32.mrf.mxu0
        %v715 = vadd.f32 0.0, %v714
        %v716 = vpop.f32.mrf.mxu0
        %v717 = vpop.f32.mrf.mxu0
        %718 = vdwg.mxu0
        %v719 = vadd.f32 %v656, %v713
        %v720 = vadd.f32 %v657, %v715
        %721 = vrot.lane.b32.xlu0 %v497, 18
        %v722 = vpop.permute.xlu0 %721
        %723 = vrot.lane.b32.xlu0 %v501, 18
        %v724 = vpop.permute.xlu0 %723
        %vm725 = vcmask 146432
        %v726 = vsel %vm725, %v722, %v724
        %vm727 = vcmp.ne.s16.totalorder %v722, 0
        %vm728 = vcmp.ne.s16.totalorder %v726, 0
        %vm729 = vcmp.ne.s16.totalorder %v724, 0
        %v730 = vsel %vm727, %v304, 0
        %v731 = vsel %vm728, %v305, 0
        %v732 = vsel %vm729, %v296, 0
        %s733 = scalar_lea.vmem %s0, 20
        %v734 = vld [vmem:[%s733] sm:$0xf]
        %738 = vrot.lane.b32.xlu0 %v730, 110
        %v739 = vpop.permute.xlu0 %738
        %740 = vrot.lane.b32.xlu0 %v731, 110
        %v741 = vpop.permute.xlu0 %740
        %742 = vrot.lane.b32.xlu0 %v732, 110
        %v743 = vpop.permute.xlu0 %742
        %vm744 = vcmask 900096
        %v745 = vsel %vm744, %v739, %v741
        %v746 = vsel %vm744, %v741, %v743
        %v748 = vsel %vm378, %v734, 0
        %v751 = vsel %vm382, %v745, 0
        %v754 = vsel %vm382, %v746, 0
        %756 = vmatprep.subr.bf16.mxu0 0
        %757 = vmatpush1.bf16.msra.mxu0 0
        %758 = vmatprep.subr.bf16.mxu0 0
        %759 = vmatpush1.bf16.msra.mxu0 0
        %760 = vmatprep.subr.bf16.mxu0 0
        %761 = vmatpush1.bf16.msra.mxu0 0
        %762 = vmatprep.subr.bf16.mxu0 0
        %763 = vmatpush1.bf16.msra.mxu0 0
        %764 = vmatprep.subr.bf16.mxu0 0
        %765 = vmatpush1.bf16.msra.mxu0 0
        %766 = vmatprep.subr.bf16.mxu0 0
        %767 = vmatpush1.bf16.msra.mxu0 0
        %768 = vmatprep.subr.bf16.mxu0 0
        %769 = vmatpush1.bf16.msra.mxu0 0
        %770 = vmatprep.subr.bf16.mxu0 %v754
        %771 = vmatpush1.bf16.msra.mxu0 %v751
        %772 = vmatprep.subr.bf16.mxu0 0
        %773 = vmatpush2.bf16.msra.mxu0 0
        %774 = vmatprep.subr.bf16.mxu0 0
        %775 = vmatpush2.bf16.msra.mxu0 0
        %776 = vmatprep.subr.bf16.mxu0 0
        %777 = vmatpush2.bf16.msra.mxu0 0
        %778 = vmatprep.subr.bf16.mxu0 0
        %779 = vmatpush2.bf16.msra.mxu0 0
        %780 = vmatprep.subr.bf16.mxu0 0
        %781 = vmatpush2.bf16.msra.mxu0 0
        %782 = vmatprep.subr.bf16.mxu0 0
        %783 = vmatpush2.bf16.msra.mxu0 0
        %784 = vmatprep.subr.bf16.mxu0 0
        %785 = vmatpush2.bf16.msra.mxu0 0
        %786 = vmatprep.subr.bf16.mxu0 0
        %787 = vmatpush2.bf16.msra.mxu0 0
        %788 = vmatprep.mubr.bf16.mxu0 0
        %789 = vmatmul.mubr.bf16.gmra.mxu0 %v748
        %v790 = vpop.f32.mrf.mxu0
        %v791 = vadd.f32 0.0, %v790
        %v792 = vpop.f32.mrf.mxu0
        %v793 = vadd.f32 0.0, %v792
        %v794 = vpop.f32.mrf.mxu0
        %v795 = vpop.f32.mrf.mxu0
        %796 = vdwg.mxu0
        %v797 = vadd.f32 %v719, %v791
        %v798 = vadd.f32 %v720, %v793
        %799 = vrot.lane.b32.xlu0 %v356, 32
        %v800 = vpop.permute.xlu0 %799
        %801 = vrot.lane.b32.xlu0 %v360, 32
        %v802 = vpop.permute.xlu0 %801
        %vm803 = vcmask 261120
        %v804 = vsel %vm803, %v800, %v802
        %vm805 = vcmp.ne.s16.totalorder %v800, 0
        %vm806 = vcmp.ne.s16.totalorder %v804, 0
        %vm807 = vcmp.ne.s16.totalorder %v802, 0
        %v808 = vsel %vm805, %v304, 0
        %v809 = vsel %vm806, %v305, 0
        %v810 = vsel %vm807, %v296, 0
        %s811 = scalar_lea.vmem %s0, 24
        %v812 = vld [vmem:[%s811] sm:$0xf]
        %816 = vrot.lane.b32.xlu0 %v808, 96
        %v817 = vpop.permute.xlu0 %816
        %818 = vrot.lane.b32.xlu0 %v809, 96
        %v819 = vpop.permute.xlu0 %818
        %820 = vrot.lane.b32.xlu0 %v810, 96
        %v821 = vpop.permute.xlu0 %820
        %vm822 = vcmask 785408
        %v823 = vsel %vm822, %v817, %v819
        %v824 = vsel %vm822, %v819, %v821
        %v826 = vsel %vm378, %v812, 0
        %v829 = vsel %vm382, %v823, 0
        %v832 = vsel %vm382, %v824, 0
        %834 = vmatprep.subr.bf16.mxu0 0
        %835 = vmatpush1.bf16.msra.mxu0 0
        %836 = vmatprep.subr.bf16.mxu0 0
        %837 = vmatpush1.bf16.msra.mxu0 0
        %838 = vmatprep.subr.bf16.mxu0 0
        %839 = vmatpush1.bf16.msra.mxu0 0
        %840 = vmatprep.subr.bf16.mxu0 0
        %841 = vmatpush1.bf16.msra.mxu0 0
        %842 = vmatprep.subr.bf16.mxu0 0
        %843 = vmatpush1.bf16.msra.mxu0 0
        %844 = vmatprep.subr.bf16.mxu0 0
        %845 = vmatpush1.bf16.msra.mxu0 0
        %846 = vmatprep.subr.bf16.mxu0 0
        %847 = vmatpush1.bf16.msra.mxu0 0
        %848 = vmatprep.subr.bf16.mxu0 %v832
        %849 = vmatpush1.bf16.msra.mxu0 %v829
        %850 = vmatprep.subr.bf16.mxu0 0
        %851 = vmatpush2.bf16.msra.mxu0 0
        %852 = vmatprep.subr.bf16.mxu0 0
        %853 = vmatpush2.bf16.msra.mxu0 0
        %854 = vmatprep.subr.bf16.mxu0 0
        %855 = vmatpush2.bf16.msra.mxu0 0
        %856 = vmatprep.subr.bf16.mxu0 0
        %857 = vmatpush2.bf16.msra.mxu0 0
        %858 = vmatprep.subr.bf16.mxu0 0
        %859 = vmatpush2.bf16.msra.mxu0 0
        %860 = vmatprep.subr.bf16.mxu0 0
        %861 = vmatpush2.bf16.msra.mxu0 0
        %862 = vmatprep.subr.bf16.mxu0 0
        %863 = vmatpush2.bf16.msra.mxu0 0
        %864 = vmatprep.subr.bf16.mxu0 0
        %865 = vmatpush2.bf16.msra.mxu0 0
        %866 = vmatprep.mubr.bf16.mxu0 0
        %867 = vmatmul.mubr.bf16.gmra.mxu0 %v826
        %v868 = vpop.f32.mrf.mxu0
        %v869 = vadd.f32 0.0, %v868
        %v870 = vpop.f32.mrf.mxu0
        %v871 = vadd.f32 0.0, %v870
        %v872 = vpop.f32.mrf.mxu0
        %v873 = vpop.f32.mrf.mxu0
        %874 = vdwg.mxu0
        %v875 = vadd.f32 %v797, %v869
        %v876 = vadd.f32 %v798, %v871
        %s877 = scalar_lea.vmem %s0, 28
        %v878 = vld [vmem:[%s877] sm:$0xf]
        %879 = vrot.lane.b32.xlu0 %v304, 95
        %v880 = vpop.permute.xlu0 %879
        %881 = vrot.lane.b32.xlu0 %v305, 95
        %v882 = vpop.permute.xlu0 %881
        %883 = vrot.lane.b32.xlu0 %v296, 95
        %v884 = vpop.permute.xlu0 %883
        %vm885 = vcmask 777216
        %v886 = vsel %vm885, %v880, %v882
        %v887 = vsel %vm885, %v882, %v884
        %v889 = vsel %vm378, %v878, 0
        %v892 = vsel %vm382, %v886, 0
        %v895 = vsel %vm382, %v887, 0
        %897 = vmatprep.subr.bf16.mxu0 0
        %898 = vmatpush1.bf16.msra.mxu0 0
        %899 = vmatprep.subr.bf16.mxu0 0
        %900 = vmatpush1.bf16.msra.mxu0 0
        %901 = vmatprep.subr.bf16.mxu0 0
        %902 = vmatpush1.bf16.msra.mxu0 0
        %903 = vmatprep.subr.bf16.mxu0 0
        %904 = vmatpush1.bf16.msra.mxu0 0
        %905 = vmatprep.subr.bf16.mxu0 0
        %906 = vmatpush1.bf16.msra.mxu0 0
        %907 = vmatprep.subr.bf16.mxu0 0
        %908 = vmatpush1.bf16.msra.mxu0 0
        %909 = vmatprep.subr.bf16.mxu0 0
        %910 = vmatpush1.bf16.msra.mxu0 0
        %911 = vmatprep.subr.bf16.mxu0 %v895
        %912 = vmatpush1.bf16.msra.mxu0 %v892
        %913 = vmatprep.subr.bf16.mxu0 0
        %914 = vmatpush2.bf16.msra.mxu0 0
        %915 = vmatprep.subr.bf16.mxu0 0
        %916 = vmatpush2.bf16.msra.mxu0 0
        %917 = vmatprep.subr.bf16.mxu0 0
        %918 = vmatpush2.bf16.msra.mxu0 0
        %919 = vmatprep.subr.bf16.mxu0 0
        %920 = vmatpush2.bf16.msra.mxu0 0
        %921 = vmatprep.subr.bf16.mxu0 0
        %922 = vmatpush2.bf16.msra.mxu0 0
        %923 = vmatprep.subr.bf16.mxu0 0
        %924 = vmatpush2.bf16.msra.mxu0 0
        %925 = vmatprep.subr.bf16.mxu0 0
        %926 = vmatpush2.bf16.msra.mxu0 0
        %927 = vmatprep.subr.bf16.mxu0 0
        %928 = vmatpush2.bf16.msra.mxu0 0
        %929 = vmatprep.mubr.bf16.mxu0 0
        %930 = vmatmul.mubr.bf16.gmra.mxu0 %v889
        %v931 = vpop.f32.mrf.mxu0
        %v932 = vadd.f32 0.0, %v931
        %v933 = vpop.f32.mrf.mxu0
        %v934 = vadd.f32 0.0, %v933
        %v935 = vpop.f32.mrf.mxu0
        %v936 = vpop.f32.mrf.mxu0
        %937 = vdwg.mxu0
        %v938 = vadd.f32 %v875, %v932
        %v939 = vadd.f32 %v876, %v934
        %940 = vrot.lane.b32.xlu0 %v497, 34
        %v941 = vpop.permute.xlu0 %940
        %942 = vrot.lane.b32.xlu0 %v501, 34
        %v943 = vpop.permute.xlu0 %942
        %vm944 = vcmask 277504
        %v945 = vsel %vm944, %v941, %v943
        %vm946 = vcmp.ne.s16.totalorder %v941, 0
        %vm947 = vcmp.ne.s16.totalorder %v945, 0
        %vm948 = vcmp.ne.s16.totalorder %v943, 0
        %v949 = vsel %vm946, %v304, 0
        %v950 = vsel %vm947, %v305, 0
        %v951 = vsel %vm948, %v296, 0
        %s952 = scalar_lea.vmem %s0, 32
        %v953 = vld [vmem:[%s952] sm:$0xf]
        %957 = vrot.lane.b32.xlu0 %v949, 94
        %v958 = vpop.permute.xlu0 %957
        %959 = vrot.lane.b32.xlu0 %v950, 94
        %v960 = vpop.permute.xlu0 %959
        %961 = vrot.lane.b32.xlu0 %v951, 94
        %v962 = vpop.permute.xlu0 %961
        %vm963 = vcmask 769024
        %v964 = vsel %vm963, %v958, %v960
        %v965 = vsel %vm963, %v960, %v962
        %v967 = vsel %vm378, %v953, 0
        %v970 = vsel %vm382, %v964, 0
        %v973 = vsel %vm382, %v965, 0
        %975 = vmatprep.subr.bf16.mxu0 0
        %976 = vmatpush1.bf16.msra.mxu0 0
        %977 = vmatprep.subr.bf16.mxu0 0
        %978 = vmatpush1.bf16.msra.mxu0 0
        %979 = vmatprep.subr.bf16.mxu0 0
        %980 = vmatpush1.bf16.msra.mxu0 0
        %981 = vmatprep.subr.bf16.mxu0 0
        %982 = vmatpush1.bf16.msra.mxu0 0
        %983 = vmatprep.subr.bf16.mxu0 0
        %984 = vmatpush1.bf16.msra.mxu0 0
        %985 = vmatprep.subr.bf16.mxu0 0
        %986 = vmatpush1.bf16.msra.mxu0 0
        %987 = vmatprep.subr.bf16.mxu0 0
        %988 = vmatpush1.bf16.msra.mxu0 0
        %989 = vmatprep.subr.bf16.mxu0 %v973
        %990 = vmatpush1.bf16.msra.mxu0 %v970
        %991 = vmatprep.subr.bf16.mxu0 0
        %992 = vmatpush2.bf16.msra.mxu0 0
        %993 = vmatprep.subr.bf16.mxu0 0
        %994 = vmatpush2.bf16.msra.mxu0 0
        %995 = vmatprep.subr.bf16.mxu0 0
        %996 = vmatpush2.bf16.msra.mxu0 0
        %997 = vmatprep.subr.bf16.mxu0 0
        %998 = vmatpush2.bf16.msra.mxu0 0
        %999 = vmatprep.subr.bf16.mxu0 0
        %1000 = vmatpush2.bf16.msra.mxu0 0
        %1001 = vmatprep.subr.bf16.mxu0 0
        %1002 = vmatpush2.bf16.msra.mxu0 0
        %1003 = vmatprep.subr.bf16.mxu0 0
        %1004 = vmatpush2.bf16.msra.mxu0 0
        %1005 = vmatprep.subr.bf16.mxu0 0
        %1006 = vmatpush2.bf16.msra.mxu0 0
        %1007 = vmatprep.mubr.bf16.mxu0 0
        %1008 = vmatmul.mubr.bf16.gmra.mxu0 %v967
        %v1009 = vpop.f32.mrf.mxu0
        %v1010 = vadd.f32 0.0, %v1009
        %v1011 = vpop.f32.mrf.mxu0
        %v1012 = vadd.f32 0.0, %v1011
        %v1013 = vpop.f32.mrf.mxu0
        %v1014 = vpop.f32.mrf.mxu0
        %1015 = vdwg.mxu0
        %v1016 = vadd.f32 %v938, %v1010
        %v1017 = vadd.f32 %v939, %v1012
        %v1018 = vld [vmem:[%s1] sm:$0xff]
        %1020 = vset.pattern.permute.xlu0 0
        %1021 = vperm.xlu0 %1020, %v1018
        %v1022 = vpop.permute.xlu0 %1021
        %v1024 = vadd.f32 %v1016, %v1022
        %v1025 = vadd.f32 %v1017, %v1022
        %vm1026 = vcmp.ge.f32.partialorder %v1024, 0.0
        %vm1027 = vcmp.ge.f32.partialorder %v1025, 0.0
        %v1028 = vmul.f32 %v1024, 0.2
        %v1029 = vmul.f32 %v1025, 0.2
        %v1030 = vsel %vm1026, %v1024, %v1028
        %v1031 = vsel %vm1027, %v1025, %v1029
        %1032 = vst [vmem:[%s260] sm:$0xff] %v1030
        %1033 = vst [vmem:[%s260 + $0x8] sm:$0xff] %v1031
        %s1034 = sand.u32 %s142, 1
        %s1035 = scalar_lea.sflag [#allocation3], %s1034
        %s1036 = sand.u32 %s142, 1
        %s1037 = smul.addr %s1036, 16
        %s1038 = scalar_lea.vmem [#allocation2], %s1037
        // Predicated region
        $region37: #{tpu_custom_call.1} parent=35 // pred_check
          %p1039 = pneg %p152
        $region38: #{tpu_custom_call.1} parent=35 // pred_check_branch
          %1041 = sbr.rel (%p1039) target = $region40
        $region39: #{tpu_custom_call.1} parent=35 // pred_region
          %s1042 = smul.u32 2, %s23
          %s1044 = ssub.s32 256, 256
          %1045 = vsyncadd %s1035, %s1044
          %s1046 = smul.addr %s22, 2
          %s1047 = sadd.s32 %s1042, %s1046
          %s1048 = smul.addr %s1047, 128
          %s1049 = scalar_lea.hbm %s4, %s1048
          %s1051 = sshll.u32 %s1038, 4
          %s1052 = int_to_ptr.vmem [resolvable:$true] %s1051
          %1054 = dma.vmem_to_hbm [thread:$0]  %s1052, 256, %s1049, %s1035
        $region40: #{tpu_custom_call.1} parent=35 // pred_fallthru
          _
      $region36: #{tpu_custom_call.1} parent=5 // pred_fallthru
        _
      %p1055 = scmp.le.s32.totalorder 2, %s13
      // Predicated region
      $region41: #{tpu_custom_call.1} parent=5 // pred_check
        %p1056 = pneg %p1055
      $region42: #{tpu_custom_call.1} parent=5 // pred_check_branch
        %1058 = sbr.rel (%p1056) target = $region44
      $region43: #{tpu_custom_call.1} parent=5 // pred_region
        %s1059 = ssub.s32 %s13, 2
        // Predicated region
        $region45: #{tpu_custom_call.1} parent=43 // pred_check
          %p1060 = pneg %p158
        $region46: #{tpu_custom_call.1} parent=43 // pred_check_branch
          %1062 = sbr.rel (%p1060) target = $region48
        $region47: #{tpu_custom_call.1} parent=43 // pred_region
          %s1063 = sand.u32 %s143, 1
          %s1064 = scalar_lea.sflag [#allocation3], %s1063
          %s1065 = sand.u32 %s143, 1
          %s1066 = smul.addr %s1065, 16
          %s1067 = scalar_lea.vmem [#allocation2], %s1066
          %1068 = dma.done %s1064, 256
        $region48: #{tpu_custom_call.1} parent=43 // pred_fallthru
          _
      $region44: #{tpu_custom_call.1} parent=5 // pred_fallthru
        _
    $region6: #{tpu_custom_call.1} parent=1 // loop_footer
      %s17 = sadd.s32 1, %s13
    $region7: #{tpu_custom_call.1} parent=1 // loop_footer_branch
      %12 = sbr.rel target = $region3
    $region8: #{tpu_custom_call.1} parent=1 // loop_exit
      _
    %1069 = vsyncpa [#allocation3], 1
    %s1070 = scalar_lea.sflag [#allocation3], 1
    %1071 = vsyncpa %s1070, 1

</llo_original>
